<compile_context>
chip_gen: v7x
topology: tpu7x:2x2x1
jax: 0.10.0
libtpu: 0.0.40
codegen_flags: <defaults>
</compile_context>

<pallas_src>
import jax
import jax.numpy as jnp
from jax.experimental import pallas as pl
from jax.experimental.pallas import tpu as pltpu

_LANE = 128


def _round_up(x, m):
    return ((x + m - 1) // m) * m


def _cdiv(a, b):
    return -(-a // b)


def _sublane(dtype):
    # Rows packed per vreg sublane group: 8 for f32, 16 for bf16, 32 for int8.
    return 8 * max(1, 4 // jnp.dtype(dtype).itemsize)


def _balanced_tile(dim, pref, align):
    """Tile ~pref, multiple of `align`, minimizing zero-padding of `dim`."""
    dim_a = _round_up(dim, align)
    if dim_a <= pref:
        return dim_a
    n_tiles = _cdiv(dim, pref)
    return _round_up(_cdiv(dim, n_tiles), align)


def _vmem_budget_bytes():
    """Generation-aware scoped-VMEM budget (leaves headroom everywhere)."""
    try:
        info = pltpu.get_tpu_info()
        cap = int(getattr(info, "vmem_capacity_bytes", 0) or 0)
        if cap > 0:
            # 3/4 of physical: ~48 MiB on v7x (64 MiB/TC), ~96 MiB on v5e/v6e.
            return min(cap * 3 // 4, 96 * 1024 * 1024)
    except Exception:
        pass
    return 48 * 1024 * 1024  # safe on every generation


def _select_tiles(B, IN, OUT, tm, tn, tk, compute_dtype, out_dtype):
    sub = _sublane(compute_dtype)
    TM = _balanced_tile(B, tm, sub)
    TK = _balanced_tile(IN, tk, _LANE)
    TN = _balanced_tile(OUT, tn, _LANE)

    # Guarantee >=2 steps on a parallel grid axis when the whole batch fits in
    # one row tile (keeps v7x's second TensorCore busy on skinny batches).
    if _cdiv(B, TM) == 1 and OUT > _LANE:
        TN = min(TN, _round_up(_cdiv(OUT, 2), _LANE))

    # Shrink tiles until the pipelined footprint fits the VMEM budget.
    cb = jnp.dtype(compute_dtype).itemsize
    ob = jnp.dtype(out_dtype).itemsize
    budget = _vmem_budget_bytes()

    def footprint(tm_, tn_, tk_):
        return (2 * tm_ * tk_ * cb        # x tile, double-buffered
                + 3 * tk_ * tn_ * cb      # w tile (up to 3-deep buffering)
                + 2 * tm_ * tn_ * ob      # out tile, double-buffered
                + 2 * tn_ * 4             # bias
                + tm_ * tn_ * 4)          # f32 accumulator scratch

    while footprint(TM, TN, TK) > budget and TK > 512:
        TK = max(512, _round_up(TK // 2, _LANE))          # keep TK >= 512 (v5e)
    while footprint(TM, TN, TK) > budget and TN > _LANE:
        TN = max(_LANE, _round_up(TN // 2, _LANE))
    while footprint(TM, TN, TK) > budget and TM > sub:
        TM = max(sub, _round_up(TM // 2, sub))

    return TM, TN, TK, int(budget)


def dense_relu_kernel(x_ref, w_ref, b_ref, o_ref, acc_ref):
    # x_ref: (TM, TK)  w_ref: (TK, TN)  b_ref: (1, TN)
    # o_ref: (TM, TN)  acc_ref: (TM, TN) f32 scratch, resident across K
    k = pl.program_id(2)
    prod = jnp.dot(x_ref[...], w_ref[...], preferred_element_type=jnp.float32)

    @pl.when(k == 0)
    def _first():
        acc_ref[...] = prod            # no zero-fill + RMW on step 0

    @pl.when(k > 0)
    def _accumulate():
        acc_ref[...] += prod

    @pl.when(k == pl.num_programs(2) - 1)
    def _finalize():
        out = acc_ref[...] + b_ref[...]          # broadcast (1, TN) over rows
        o_ref[...] = jnp.maximum(out, 0.0).astype(o_ref.dtype)


def _dense_relu_padded(xp, wp, b2d, *, TM, TN, TK, out_dtype, vmem_limit):
    """xp (Mp,Kp), wp (Kp,Np) already padded/cast; b2d (1,Np) f32."""
    Mp, Kp = xp.shape
    _, Np = wp.shape
    grid = (Mp // TM, Np // TN, Kp // TK)

    # Weight BlockSpec; deeper buffering for skinny-batch weight streaming.
    w_spec = pl.BlockSpec((TK, TN), lambda i, j, k: (k, j))
    if TM <= 64 and grid[2] > 1:
        try:
            w_spec = pl.BlockSpec((TK, TN), lambda i, j, k: (k, j),
                                  pipeline_mode=pl.Buffered(3))
        except Exception:
            pass  # fall back to default 2-deep buffering

    cb = xp.dtype.itemsize
    ob = jnp.dtype(out_dtype).itemsize
    cost = pl.CostEstimate(
        flops=2 * Mp * Np * Kp,
        bytes_accessed=(Mp * Kp + Kp * Np) * cb + Mp * Np * ob + Np * 4,
        transcendentals=0,
    )

    return pl.pallas_call(
        dense_relu_kernel,
        out_shape=jax.ShapeDtypeStruct((Mp, Np), out_dtype),
        grid_spec=pltpu.PrefetchScalarGridSpec(
            num_scalar_prefetch=0,
            grid=grid,
            in_specs=[
                pl.BlockSpec((TM, TK), lambda i, j, k: (i, k)),   # x tile
                w_spec,                                           # w tile
                pl.BlockSpec((1, TN), lambda i, j, k: (0, j)),    # bias tile
            ],
            out_specs=pl.BlockSpec((TM, TN), lambda i, j, k: (i, j)),
            scratch_shapes=[pltpu.VMEM((TM, TN), jnp.float32)],
        ),
        compiler_params=pltpu.CompilerParams(
            dimension_semantics=("parallel", "parallel", "arbitrary"),
            vmem_limit_bytes=int(vmem_limit),
        ),
        cost_estimate=cost,
    )(xp, wp, b2d)


def dense_relu(x, w, b, *, tm=512, tn=512, tk=1024,
               compute_dtype=jnp.bfloat16, out_dtype=None):
    """relu(x @ w + b). x: (B, IN), w: (IN, OUT), b: (OUT,) -> (B, OUT)."""
    B, IN = x.shape
    IN_w, OUT = w.shape
    assert IN == IN_w and b.shape == (OUT,)
    out_dtype = out_dtype or x.dtype

    TM, TN, TK, budget = _select_tiles(B, IN, OUT, tm, tn, tk,
                                       compute_dtype, out_dtype)
    Mp, Kp, Np = _round_up(B, TM), _round_up(IN, TK), _round_up(OUT, TN)

    # Zero-pad to tile multiples (neutral for the matmul), cast to MXU dtype.
    xp = x if (Mp == B and Kp == IN) else jnp.pad(x, ((0, Mp - B), (0, Kp - IN)))
    wp = w if (Kp == IN and Np == OUT) else jnp.pad(w, ((0, Kp - IN), (0, Np - OUT)))
    bp = b if Np == OUT else jnp.pad(b, (0, Np - OUT))

    xp = xp.astype(compute_dtype)
    wp = wp.astype(compute_dtype)
    b2d = bp.astype(jnp.float32).reshape(1, Np)

    out = _dense_relu_padded(xp, wp, b2d, TM=TM, TN=TN, TK=TK,
                             out_dtype=out_dtype, vmem_limit=budget)
    return out if (Mp == B and Np == OUT) else out[:B, :OUT]


def make_dense_relu(w, b, *, tm=512, tn=512, tk=1024,
                    compute_dtype=jnp.bfloat16, out_dtype=jnp.float32):
    """Pre-pads/casts the weights ONCE (hoists jnp.pad out of the per-call
    path); returns apply(x) for repeated inference calls."""
    IN, OUT = w.shape
    assert b.shape == (OUT,)
    # Size tiles for the worst-case row tile (TM == tm) so they fit any batch.
    TM_max, TN, TK, budget = _select_tiles(tm, IN, OUT, tm, tn, tk,
                                           compute_dtype, out_dtype)
    Kp, Np = _round_up(IN, TK), _round_up(OUT, TN)
    wp = jnp.pad(w, ((0, Kp - IN), (0, Np - OUT))).astype(compute_dtype)
    b2d = jnp.pad(b, (0, Np - OUT)).astype(jnp.float32).reshape(1, Np)
    sub = _sublane(compute_dtype)

    def apply(x):
        B, IN_x = x.shape
        assert IN_x == IN
        TM = min(TM_max, _balanced_tile(B, tm, sub))
        Mp = _round_up(B, TM)
        xp = x if Mp == B else jnp.pad(x, ((0, Mp - B), (0, 0)))
        if Kp != IN:
            xp = jnp.pad(xp, ((0, 0), (0, Kp - IN)))
        xp = xp.astype(compute_dtype)
        out = _dense_relu_padded(xp, wp, b2d, TM=TM, TN=TN, TK=TK,
                                 out_dtype=out_dtype, vmem_limit=budget)
        return out if (Mp == B and Np == OUT) else out[:B, :OUT]

    return apply


def init_dense_params(key, in_features, out_features):
    """Deterministic params matching nn.Linear + kaiming_normal_ weight init."""
    kw, kb = jax.random.split(key)
    # he_normal / kaiming_normal_: std = sqrt(2 / fan_in)
    std = (2.0 / in_features) ** 0.5
    # PyTorch weight is (out, in); we store the transpose (in, out).
    w = jax.random.normal(kw, (in_features, out_features), jnp.float32) * std
    # nn.Linear default bias init: U(-1/sqrt(fan_in), 1/sqrt(fan_in))
    bound = 1.0 / (in_features ** 0.5)
    b = jax.random.uniform(kb, (out_features,), jnp.float32,
                           minval=-bound, maxval=bound)
    return w, b


def _ref_dense_relu(x, w, b, compute_dtype=jnp.bfloat16):
    """Reference matching the kernel's numerics: bf16-rounded operands, f32 acc."""
    xr = x.astype(compute_dtype).astype(jnp.float32)
    wr = w.astype(compute_dtype).astype(jnp.float32)
    y = jnp.dot(xr, wr, precision=jax.lax.Precision.HIGHEST) + b
    return jnp.maximum(y, 0.0)


if __name__ == "__main__":
    key = jax.random.PRNGKey(0)
    k_x, k_p, k_x2, k_p2, k_x3, k_p3 = jax.random.split(key, 6)

    # 1) Module-sized demo (small, unaligned dims -> exercises the padding path).
    batch, in_features, out_features = 8, 32, 64
    x = jax.random.normal(k_x, (batch, in_features), jnp.float32)
    w, b = init_dense_params(k_p, in_features, out_features)

    out = dense_relu(x, w, b)
    jax.block_until_ready(out)
    ref = _ref_dense_relu(x, w, b)
    assert out.shape == (batch, out_features)
    assert jnp.allclose(out, ref, atol=1e-2, rtol=1e-2)

    # 2) Aligned shapes with grid > 1 on every axis (tiled f32-accumulator path).
    B2, IN2, OUT2 = 256, 1024, 512
    x2 = jax.random.normal(k_x2, (B2, IN2), jnp.float32)
    w2, b2 = init_dense_params(k_p2, IN2, OUT2)

    out2 = dense_relu(x2, w2, b2, tm=128, tn=256, tk=512)   # grid = (2, 2, 2)
    jax.block_until_ready(out2)
    ref2 = _ref_dense_relu(x2, w2, b2)
    assert out2.shape == (B2, OUT2)
    assert jnp.allclose(out2, ref2, atol=1e-2, rtol=1e-2)

    # 3) Skinny batch via the pre-padded-weight closure (megacore N-split path).
    B3, IN3, OUT3 = 4, 256, 512
    x3 = jax.random.normal(k_x3, (B3, IN3), jnp.float32)
    w3, b3 = init_dense_params(k_p3, IN3, OUT3)

    dense3 = make_dense_relu(w3, b3)        # weights padded/cast once
    out3 = dense3(x3)
    jax.block_until_ready(out3)
    ref3 = _ref_dense_relu(x3, w3, b3)
    assert out3.shape == (B3, OUT3)
    assert jnp.allclose(out3, ref3, atol=1e-2, rtol=1e-2)

    print("KERNEL_OK")
</pallas_src>

<mosaic_0001>
module attributes {stable_mosaic.version = 11 : i64} {
  func.func @dense_relu_kernel(%arg0: i32, %arg1: i32, %arg2: i32, %arg3: memref<16x128xbf16, #tpu.memory_space<vmem>>, %arg4: memref<128x128xbf16, #tpu.memory_space<vmem>>, %arg5: memref<1x128xf32, #tpu.memory_space<vmem>>, %arg6: memref<16x128xf32, #tpu.memory_space<vmem>>, %arg7: memref<16x128xf32, #tpu.memory_space<vmem>>) attributes {dimension_semantics = [#tpu.dimension_semantics<parallel>, #tpu.dimension_semantics<parallel>, #tpu.dimension_semantics<arbitrary>], iteration_bounds = array<i64: 1, 1, 1>, scalar_prefetch = 0 : i64, scratch_operands = 1 : i64, tpu.core_type = #tpu.core_type<tc>, window_params = [{transform_indices = @transform_0, window_bounds = array<i64: 16, 128>}, {transform_indices = @transform_1, window_bounds = array<i64: 128, 128>}, {transform_indices = @transform_2, window_bounds = array<i64: 1, 128>}, {transform_indices = @transform_3, window_bounds = array<i64: 16, 128>}]} {
    %c0 = arith.constant 0 : index
    %c0_0 = arith.constant 0 : index
    %0 = vector.load %arg3[%c0, %c0_0] : memref<16x128xbf16, #tpu.memory_space<vmem>>, vector<16x128xbf16>
    %c0_1 = arith.constant 0 : index
    %c0_2 = arith.constant 0 : index
    %1 = vector.load %arg4[%c0_1, %c0_2] : memref<128x128xbf16, #tpu.memory_space<vmem>>, vector<128x128xbf16>
    %cst = arith.constant dense<0.000000e+00> : vector<16x128xf32>
    %2 = tpu.matmul %0, %1, %cst {dimension_numbers = #tpu.dot_dimension_numbers<[1], [0], [0], [1], [0, 0, 1, 1], [], []>} : vector<16x128xbf16>, vector<128x128xbf16>, vector<16x128xf32> -> vector<16x128xf32>
    %c0_i32 = arith.constant 0 : i32
    %3 = arith.cmpi eq, %arg2, %c0_i32 : i32
    %4 = arith.extui %3 : i1 to i32
    %c0_i32_3 = arith.constant 0 : i32
    %5 = arith.cmpi ne, %4, %c0_i32_3 : i32
    scf.if %5 {
      %c0_8 = arith.constant 0 : index
      %c0_9 = arith.constant 0 : index
      %12 = vector.load %arg7[%c0_8, %c0_9] : memref<16x128xf32, #tpu.memory_space<vmem>>, vector<16x128xf32>
      tpu.vector_store %arg7[%c0_8, %c0_9], %2 {strides = array<i32>} : memref<16x128xf32, #tpu.memory_space<vmem>>, vector<16x128xf32>,
    } else {
    }
    %c0_i32_4 = arith.constant 0 : i32
    %6 = arith.cmpi sgt, %arg2, %c0_i32_4 : i32
    %7 = arith.extui %6 : i1 to i32
    %c0_i32_5 = arith.constant 0 : i32
    %8 = arith.cmpi ne, %7, %c0_i32_5 : i32
    scf.if %8 {
      %c0_8 = arith.constant 0 : index
      %c0_9 = arith.constant 0 : index
      %12 = vector.load %arg7[%c0_8, %c0_9] : memref<16x128xf32, #tpu.memory_space<vmem>>, vector<16x128xf32>
      %13 = arith.addf %12, %2 : vector<16x128xf32>
      %c0_10 = arith.constant 0 : index
      %c0_11 = arith.constant 0 : index
      %14 = vector.load %arg7[%c0_10, %c0_11] : memref<16x128xf32, #tpu.memory_space<vmem>>, vector<16x128xf32>
      tpu.vector_store %arg7[%c0_10, %c0_11], %13 {strides = array<i32>} : memref<16x128xf32, #tpu.memory_space<vmem>>, vector<16x128xf32>,
    } else {
    }
    %c0_i32_6 = arith.constant 0 : i32
    %9 = arith.cmpi eq, %arg2, %c0_i32_6 : i32
    %10 = arith.extui %9 : i1 to i32
    %c0_i32_7 = arith.constant 0 : i32
    %11 = arith.cmpi ne, %10, %c0_i32_7 : i32
    scf.if %11 {
      %c0_8 = arith.constant 0 : index
      %c0_9 = arith.constant 0 : index
      %12 = vector.load %arg7[%c0_8, %c0_9] : memref<16x128xf32, #tpu.memory_space<vmem>>, vector<16x128xf32>
      %c0_10 = arith.constant 0 : index
      %c0_11 = arith.constant 0 : index
      %13 = vector.load %arg5[%c0_10, %c0_11] : memref<1x128xf32, #tpu.memory_space<vmem>>, vector<1x128xf32>
      %14 = vector.broadcast %13 : vector<1x128xf32> to vector<16x128xf32>
      %15 = arith.addf %12, %14 : vector<16x128xf32>
      %cst_12 = arith.constant 0.000000e+00 : f32
      %16 = vector.broadcast %cst_12 : f32 to vector<16x128xf32>
      %17 = arith.maximumf %15, %16 : vector<16x128xf32>
      %c0_13 = arith.constant 0 : index
      %c0_14 = arith.constant 0 : index
      %18 = vector.load %arg6[%c0_13, %c0_14] : memref<16x128xf32, #tpu.memory_space<vmem>>, vector<16x128xf32>
      tpu.vector_store %arg6[%c0_13, %c0_14], %17 {strides = array<i32>} : memref<16x128xf32, #tpu.memory_space<vmem>>, vector<16x128xf32>,
    } else {
    }
    return
  }
  func.func @transform_0(%arg0: i32, %arg1: i32, %arg2: i32) -> (i32, i32) {
    %c0_i32 = arith.constant 0 : i32
    return %arg0, %arg2 : i32, i32
  }
  func.func @transform_1(%arg0: i32, %arg1: i32, %arg2: i32) -> (i32, i32) {
    %c0_i32 = arith.constant 0 : i32
    return %arg2, %arg1 : i32, i32
  }
  func.func @transform_2(%arg0: i32, %arg1: i32, %arg2: i32) -> (i32, i32) {
    %c0_i32 = arith.constant 0 : i32
    %c0_i32_0 = arith.constant 0 : i32
    return %c0_i32, %arg1 : i32, i32
  }
  func.func @transform_3(%arg0: i32, %arg1: i32, %arg2: i32) -> (i32, i32) {
    %c0_i32 = arith.constant 0 : i32
    return %arg0, %arg1 : i32, i32
  }
}

</mosaic_0001>

<llo_original>
// kernel: tpu_custom_call.1
$region0: #{tpu_custom_call.1}
  #allocation0 [shape = 'u32[]', space=smem, size = 0x4, offset = 0x4, fixed_abs, tag = 'smem constant byte address 0x4 - core index']
  #allocation1 [shape = 'u32[144,128]{1,0:T(1,128)}', space=vmem, size = 0x12000, scoped, tag = 'internal scratch']
  #allocation2 [shape = 'f32[16,128]{1,0:T(8,128)}', space=vmem, size = 0x2000, scoped, tag = 'scratch operand']
  %s0 = inlined_call_operand.hbm [shape: bf16[16,128], index: 0, kind: input, shape index: {}]
  %s1 = inlined_call_operand.hbm [shape: bf16[128,128], index: 1, kind: input, shape index: {}]
  %s2 = inlined_call_operand.vmem [shape: f32[1,128], index: 2, kind: input, shape index: {}]
  %s3 = inlined_call_operand.hbm [shape: f32[16,128], index: 3, kind: output, shape index: {}]
  %s4 = sld [smem:[#allocation0]]
  $region42: #{tpu_custom_call.1} parent=0
    _
  %s6 = ssub.s32 1, %s4
  %s7 = scalar_select 0, %s6, %s4
  $region1: #{tpu_custom_call.1} parent=0
    #allocation3 [shape = 'u8[4096]{0}', space=vmem, size = 0x1000, scoped, tag = 'input window, operand 0, single buffered']
    #allocation4 [shape = 's32[1]{0}', space=sflag, size = 0x4, scoped, tag = 'scoped memory for tpu_custom_call.1']
    #allocation5 [shape = 's32[1]{0}', space=sflag, size = 0x4, scoped, tag = 'scoped memory for tpu_custom_call.1']
    #allocation6 [shape = 'u8[32768]{0}', space=vmem, size = 0x8000, scoped, tag = 'input window, operand 1, single buffered']
    #allocation7 [shape = 's32[1]{0}', space=sflag, size = 0x4, scoped, tag = 'scoped memory for tpu_custom_call.1']
    #allocation8 [shape = 'u8[8192]{0}', space=vmem, size = 0x2000, scoped, tag = 'output window, operand 0, single buffered']
    %8 = vsyncpa [#allocation4], 0
    %9 = vsyncpa [#allocation7], 0
    %10 = vsyncpa [#allocation5], 0
    // Predicated region
    $region2: #{tpu_custom_call.1} parent=1 // pred_check
      _
    $region3: #{tpu_custom_call.1} parent=1 // pred_check_branch
      %12 = sbr.rel (0) target = $region5
    $region4: #{tpu_custom_call.1} parent=1 // pred_region
      %s14 = ssub.s32 128, 128
      %15 = vsyncadd [#allocation4], %s14
      %s16 = sshll.u32 [#allocation3], 4
      %s17 = int_to_ptr.vmem [resolvable:$true] %s16
      %22 = dma.hbm_to_vmem [thread:$0]  %s0, 128, %s17, [#allocation4], 64, 64, 4
    $region5: #{tpu_custom_call.1} parent=1 // pred_fallthru
      _
    // Predicated region
    $region6: #{tpu_custom_call.1} parent=1 // pred_check
      _
    $region7: #{tpu_custom_call.1} parent=1 // pred_check_branch
      %24 = sbr.rel (0) target = $region9
    $region8: #{tpu_custom_call.1} parent=1 // pred_region
      %s26 = ssub.s32 1024, 1024
      %27 = vsyncadd [#allocation7], %s26
      %s28 = sshll.u32 [#allocation6], 4
      %s29 = int_to_ptr.vmem [resolvable:$true] %s28
      %34 = dma.hbm_to_vmem [thread:$0]  %s1, 1024, %s29, [#allocation7], 64, 64, 4
    $region9: #{tpu_custom_call.1} parent=1 // pred_fallthru
      _
    // Predicated region
    $region10: #{tpu_custom_call.1} parent=1 // pred_check
      _
    $region11: #{tpu_custom_call.1} parent=1 // pred_check_branch
      %36 = sbr.rel (0) target = $region13
    $region12: #{tpu_custom_call.1} parent=1 // pred_region
      _
    $region13: #{tpu_custom_call.1} parent=1 // pred_fallthru
      _
    // Predicated region
    $region14: #{tpu_custom_call.1} parent=1 // pred_check
      _
    $region15: #{tpu_custom_call.1} parent=1 // pred_check_branch
      %38 = sbr.rel (0) target = $region17
    $region16: #{tpu_custom_call.1} parent=1 // pred_region
      %39 = dma.done [#allocation4], 128
    $region17: #{tpu_custom_call.1} parent=1 // pred_fallthru
      _
    // Predicated region
    $region18: #{tpu_custom_call.1} parent=1 // pred_check
      _
    $region19: #{tpu_custom_call.1} parent=1 // pred_check_branch
      %41 = sbr.rel (0) target = $region21
    $region20: #{tpu_custom_call.1} parent=1 // pred_region
      %42 = dma.done [#allocation7], 1024
    $region21: #{tpu_custom_call.1} parent=1 // pred_fallthru
      _
    %v44 = vld [vmem:[#allocation3] sm:$0xf]
    %v45 = vld [vmem:[#allocation3 + $0x4] sm:$0xf]
    %v46 = vld [vmem:[#allocation6] sm:$0xf]
    %v47 = vld [vmem:[#allocation6 + $0x4] sm:$0xf]
    %v48 = vld [vmem:[#allocation6 + $0x8] sm:$0xf]
    %v49 = vld [vmem:[#allocation6 + $0xc] sm:$0xf]
    %v50 = vld [vmem:[#allocation6 + $0x10] sm:$0xf]
    %v51 = vld [vmem:[#allocation6 + $0x14] sm:$0xf]
    %v52 = vld [vmem:[#allocation6 + $0x18] sm:$0xf]
    %v53 = vld [vmem:[#allocation6 + $0x1c] sm:$0xf]
    %v54 = vld [vmem:[#allocation6 + $0x20] sm:$0xf]
    %v55 = vld [vmem:[#allocation6 + $0x24] sm:$0xf]
    %v56 = vld [vmem:[#allocation6 + $0x28] sm:$0xf]
    %v57 = vld [vmem:[#allocation6 + $0x2c] sm:$0xf]
    %v58 = vld [vmem:[#allocation6 + $0x30] sm:$0xf]
    %v59 = vld [vmem:[#allocation6 + $0x34] sm:$0xf]
    %v60 = vld [vmem:[#allocation6 + $0x38] sm:$0xf]
    %v61 = vld [vmem:[#allocation6 + $0x3c] sm:$0xf]
    %v64 = vunpack.c.l.b16 %v44
    %v65 = vunpack.c.l.b16 %v45
    %v66 = vpack.c.b16 %v65, %v64
    %v84 = vunpack.c.l.b16 %v46
    %v85 = vunpack.c.l.b16 %v47
    %v86 = vunpack.c.l.b16 %v48
    %v87 = vunpack.c.l.b16 %v49
    %v88 = vunpack.c.l.b16 %v50
    %v89 = vunpack.c.l.b16 %v51
    %v90 = vunpack.c.l.b16 %v52
    %v91 = vunpack.c.l.b16 %v53
    %v92 = vunpack.c.l.b16 %v54
    %v93 = vunpack.c.l.b16 %v55
    %v94 = vunpack.c.l.b16 %v56
    %v95 = vunpack.c.l.b16 %v57
    %v96 = vunpack.c.l.b16 %v58
    %v97 = vunpack.c.l.b16 %v59
    %v98 = vunpack.c.l.b16 %v60
    %v99 = vunpack.c.l.b16 %v61
    %v100 = vpack.c.b16 %v85, %v84
    %v101 = vpack.c.b16 %v87, %v86
    %v102 = vpack.c.b16 %v89, %v88
    %v103 = vpack.c.b16 %v91, %v90
    %v104 = vpack.c.b16 %v93, %v92
    %v105 = vpack.c.b16 %v95, %v94
    %v106 = vpack.c.b16 %v97, %v96
    %v107 = vpack.c.b16 %v99, %v98
    %116 = vmatprep.subr.bf16.mxu0 0
    %117 = vmatpush1.bf16.msra.mxu0 %v100
    %118 = vmatprep.subr.bf16.mxu0 0
    %119 = vmatpush1.bf16.msra.mxu0 %v101
    %120 = vmatprep.subr.bf16.mxu0 0
    %121 = vmatpush1.bf16.msra.mxu0 %v102
    %122 = vmatprep.subr.bf16.mxu0 0
    %123 = vmatpush1.bf16.msra.mxu0 %v103
    %124 = vmatprep.subr.bf16.mxu0 0
    %125 = vmatpush1.bf16.msra.mxu0 %v104
    %126 = vmatprep.subr.bf16.mxu0 0
    %127 = vmatpush1.bf16.msra.mxu0 %v105
    %128 = vmatprep.subr.bf16.mxu0 0
    %129 = vmatpush1.bf16.msra.mxu0 %v106
    %130 = vmatprep.subr.bf16.mxu0 0
    %131 = vmatpush1.bf16.msra.mxu0 %v107
    %132 = vmatprep.subr.bf16.mxu0 0
    %133 = vmatpush1.bf16.msra.mxu0 0
    %134 = vmatprep.subr.bf16.mxu0 0
    %135 = vmatpush1.bf16.msra.mxu0 0
    %136 = vmatprep.subr.bf16.mxu0 0
    %137 = vmatpush1.bf16.msra.mxu0 0
    %138 = vmatprep.subr.bf16.mxu0 0
    %139 = vmatpush1.bf16.msra.mxu0 0
    %140 = vmatprep.subr.bf16.mxu0 0
    %141 = vmatpush1.bf16.msra.mxu0 0
    %142 = vmatprep.subr.bf16.mxu0 0
    %143 = vmatpush1.bf16.msra.mxu0 0
    %144 = vmatprep.subr.bf16.mxu0 0
    %145 = vmatpush1.bf16.msra.mxu0 0
    %146 = vmatprep.subr.bf16.mxu0 0
    %147 = vmatpush1.bf16.msra.mxu0 0
    %148 = vmatprep.mubr.bf16.mxu0 0
    %149 = vmatmul.mubr.bf16.gmra.mrb[0].mxu0 %v66
    %v150 = vpop.f32.mrb[0].mxu0
    %v151 = vadd.f32 0.0, %v150
    %v152 = vpop.f32.mrb[0].mxu0
    %v153 = vpop.f32.mrb[0].mxu0
    %v154 = vadd.f32 0.0, %v153
    %v155 = vpop.f32.mrb[0].mxu0
    %156 = vdwg.mxu0
    %p157 = scmp.eq.s32.totalorder 0, 0
    // Predicated region
    $region22: #{tpu_custom_call.1} parent=1 // pred_check
      %p158 = pneg %p157
    $region23: #{tpu_custom_call.1} parent=1 // pred_check_branch
      %160 = sbr.rel (%p158) target = $region25
    $region24: #{tpu_custom_call.1} parent=1 // pred_region
      %161 = vst [vmem:[#allocation2] sm:$0xff] %v151
      %162 = vst [vmem:[#allocation2 + $0x8] sm:$0xff] %v154
    $region25: #{tpu_custom_call.1} parent=1 // pred_fallthru
      _
    %p163 = scmp.gt.s32.totalorder 0, 0
    // Predicated region
    $region26: #{tpu_custom_call.1} parent=1 // pred_check
      %p164 = pneg %p163
    $region27: #{tpu_custom_call.1} parent=1 // pred_check_branch
      %166 = sbr.rel (%p164) target = $region29
    $region28: #{tpu_custom_call.1} parent=1 // pred_region
      %v167 = vld [vmem:[#allocation2] sm:$0xff]
      %v168 = vld [vmem:[#allocation2 + $0x8] sm:$0xff]
      %v169 = vadd.f32 %v167, %v151
      %v170 = vadd.f32 %v168, %v154
      %171 = vst [vmem:[#allocation2] sm:$0xff] %v169
      %172 = vst [vmem:[#allocation2 + $0x8] sm:$0xff] %v170
    $region29: #{tpu_custom_call.1} parent=1 // pred_fallthru
      _
    // Predicated region
    $region30: #{tpu_custom_call.1} parent=1 // pred_check
      %p173 = pneg %p157
    $region31: #{tpu_custom_call.1} parent=1 // pred_check_branch
      %175 = sbr.rel (%p173) target = $region33
    $region32: #{tpu_custom_call.1} parent=1 // pred_region
      %v176 = vld [vmem:[#allocation2] sm:$0xff]
      %v177 = vld [vmem:[#allocation2 + $0x8] sm:$0xff]
      %v178 = vld [vmem:[%s2] sm:$0x1]
      %v180 = vlaneseq
      %v181 = vshrl.u32 %v180, 7
      %v182 = vsub.s32 0, %v181
      %v183 = vrot.slane %v178, %v182
      %v185 = vadd.f32 %v176, %v183
      %v186 = vadd.f32 %v177, %v183
      %v187 = vmax.f32 %v185, 0.0
      %v188 = vmax.f32 %v186, 0.0
      %189 = vst [vmem:[#allocation8] sm:$0xff] %v187
      %190 = vst [vmem:[#allocation8 + $0x8] sm:$0xff] %v188
    $region33: #{tpu_custom_call.1} parent=1 // pred_fallthru
      _
    // Predicated region
    $region34: #{tpu_custom_call.1} parent=1 // pred_check
      _
    $region35: #{tpu_custom_call.1} parent=1 // pred_check_branch
      %192 = sbr.rel (0) target = $region37
    $region36: #{tpu_custom_call.1} parent=1 // pred_region
      %s194 = ssub.s32 256, 256
      %195 = vsyncadd [#allocation5], %s194
      %s196 = sshll.u32 [#allocation8], 4
      %s197 = int_to_ptr.vmem [resolvable:$true] %s196
      %202 = dma.vmem_to_hbm [thread:$0]  %s197, 256, %s3, [#allocation5], 128, 128, 8
    $region37: #{tpu_custom_call.1} parent=1 // pred_fallthru
      _
    // Predicated region
    $region38: #{tpu_custom_call.1} parent=1 // pred_check
      _
    $region39: #{tpu_custom_call.1} parent=1 // pred_check_branch
      %204 = sbr.rel (0) target = $region41
    $region40: #{tpu_custom_call.1} parent=1 // pred_region
      %205 = dma.done [#allocation5], 256
    $region41: #{tpu_custom_call.1} parent=1 // pred_fallthru
      _
    %206 = vsyncpa [#allocation4], 1
    %207 = vsyncpa [#allocation7], 1
    %208 = vsyncpa [#allocation5], 1

</llo_original>
